<compile_context>
chip_gen: v6e
topology: v6e:2x2x1
jax: 0.10.0
libtpu: 0.0.40
codegen_flags: <defaults>
</compile_context>

<pallas_src>
import functools

import jax
import jax.numpy as jnp
from jax.experimental import pallas as pl
from jax.experimental.pallas import tpu as pltpu


def _cdiv(a, b):
    return (a + b - 1) // b


def _round_up(a, b):
    return _cdiv(a, b) * b


def _vmem_capacity_bytes():
    """Per-generation VMEM capacity (v5e/v6e: 128 MiB, v7x: 64 MiB)."""
    try:
        info = pltpu.get_tpu_info()
        cap = getattr(info, "vmem_capacity_bytes", None)
        if cap:
            return int(cap)
    except Exception:
        pass
    return 64 * 1024 * 1024  # conservative fallback (v7x per-TensorCore VMEM)


def _pick_tile_b(b, c, itemsize):
    """Largest batch tile that fits a conservative VMEM budget, capped at 512
    (throughput flattens; always safe on the 64 MiB v7x part) and capped so the
    grid has >=2 tiles when the batch is big enough (megacore on v7x)."""
    vmem = _vmem_capacity_bytes()
    budget = vmem // 4                       # headroom for double-buffering/spill
    c_pad = _round_up(c, 128)                # lane padding of the logits tile
    # 2x double-buffered logits input + ~5 live [TB, C] f32-equivalents
    # (f32 copy, shifted, exp/select streams) + small lane-dense row buffers.
    per_row = c_pad * (2 * itemsize + 5 * 4) + 64
    tb = budget // max(per_row, 1)
    tb = min(tb, 512)
    tb = min(tb, max(8, _round_up(_cdiv(b, 2), 8)))   # >=2 tiles when possible
    tb = min(tb, _round_up(b, 8))
    if tb >= 128:
        tb = (tb // 128) * 128               # lane-dense row stores want 128-mults
    tb = max(8, (tb // 8) * 8)
    return int(tb)


def _focal_loss_kernel(logits_ref, targets_ref, *rest, gamma, reduction,
                       use_weight, total_b, tile_b):
    if use_weight:
        at_ref, out_ref = rest
    else:
        (out_ref,) = rest

    logits = logits_ref[...].astype(jnp.float32)        # [TB, C] (f32 math)
    t_row = targets_ref[0]                               # [1, TB] int32 (lane-dense)
    t_col = jnp.transpose(t_row, (1, 0))                 # [TB, 1] (one XLU transpose)

    # Numerically stable log-softmax pieces (no [TB, C] log_probs materialized).
    m = jnp.max(logits, axis=-1, keepdims=True)          # [TB, 1]
    shifted = logits - m                                  # [TB, C]
    lse = jnp.log(jnp.sum(jnp.exp(shifted), axis=-1, keepdims=True))  # [TB, 1]

    # "Gather" at the target class via a broadcast compare against a (1, C) iota.
    class_ids = jax.lax.broadcasted_iota(jnp.int32, (1, logits.shape[1]), 1)
    hit = class_ids == t_col                              # [TB, C] bool

    shifted_at_t = jnp.sum(jnp.where(hit, shifted, 0.0), axis=-1, keepdims=True)
    log_pt = shifted_at_t - lse                           # [TB, 1]
    pt = jnp.exp(log_pt)                                  # [TB, 1]

    # focal_term = (1 - pt) ** gamma
    g = float(gamma)
    if g == 0.0:
        focal = jnp.ones_like(pt)
    elif g.is_integer() and 1 <= int(g) <= 4:
        base = jnp.maximum(1.0 - pt, 0.0)                 # repeated multiply (no pow)
        focal = base
        for _ in range(int(g) - 1):
            focal = focal * base
    else:
        base = jnp.maximum(1.0 - pt, 1e-30)               # avoid log(0) in pow path
        focal = base ** g

    loss_col = -(focal * log_pt)                          # [TB, 1]
    loss_row = jnp.transpose(loss_col, (1, 0))            # [1, TB] lane-dense

    if use_weight:
        loss_row = loss_row * at_ref[0]                   # [1, TB] per-row weight

    if reduction == 'none':
        out_ref[...] = loss_row.reshape(out_ref.shape)    # lane-dense store
    else:
        # Mask padded batch rows (lanes) of the last tile, emit per-tile sum.
        i = pl.program_id(0)
        lane = jax.lax.broadcasted_iota(jnp.int32, loss_row.shape, 1) + i * tile_b
        masked = jnp.where(lane < total_b, loss_row, 0.0)
        out_ref[...] = jnp.sum(masked).reshape(1, 1, 1)


def sparse_categorical_focal_loss(logits, targets, *, gamma=2.0, weight=None,
                                  reduction='mean', tile_b=None):
    """Pallas TPU implementation of SparseCategoricalFocalLoss.forward."""
    assert reduction in ('mean', 'sum', 'none')
    B, C = logits.shape
    use_weight = weight is not None
    itemsize = jnp.dtype(logits.dtype).itemsize

    if tile_b is None:
        tile_b = _pick_tile_b(B, C, itemsize)
    tile_b = max(8, (int(tile_b) // 8) * 8)
    num_tiles = _cdiv(B, tile_b)
    b_pad = num_tiles * tile_b

    # Pad the batch so every grid step sees a full tile; padded rows are masked
    # in-kernel for 'mean'/'sum' and sliced off in the wrapper for 'none'.
    targets_i32 = targets.astype(jnp.int32)
    logits_p = logits
    if b_pad != B:
        logits_p = jnp.pad(logits_p, ((0, b_pad - B), (0, 0)))
        targets_i32 = jnp.pad(targets_i32, ((0, b_pad - B),))

    # Lane-dense per-row streams: (num_tiles, 1, tile_b) with (1, 1, TB) blocks.
    targets_p = targets_i32.reshape(num_tiles, 1, tile_b)

    in_specs = [
        pl.BlockSpec((tile_b, C), lambda i: (i, 0)),        # logits: batch-tiled
        pl.BlockSpec((1, 1, tile_b), lambda i: (i, 0, 0)),  # targets: lane-dense
    ]
    args = [logits_p, targets_p]

    if use_weight:
        # Per-row class weight gathered in the wrapper (tiny O(B) XLA gather);
        # kernel only does one (1, TB) multiply.
        w = jnp.asarray(weight, jnp.float32)
        at_p = w[targets_i32].reshape(num_tiles, 1, tile_b).astype(jnp.float32)
        in_specs.append(pl.BlockSpec((1, 1, tile_b), lambda i: (i, 0, 0)))
        args.append(at_p)

    if reduction == 'none':
        out_shape = jax.ShapeDtypeStruct((num_tiles, 1, tile_b), jnp.float32)
        out_spec = pl.BlockSpec((1, 1, tile_b), lambda i: (i, 0, 0))
        out_bytes = b_pad * 4
    else:
        # Disjoint per-tile partial sums -> batch axis stays "parallel".
        out_shape = jax.ShapeDtypeStruct((num_tiles, 1, 1), jnp.float32)
        out_spec = pl.BlockSpec((1, 1, 1), lambda i: (i, 0, 0))
        out_bytes = num_tiles * 4

    kernel = functools.partial(
        _focal_loss_kernel, gamma=float(gamma), reduction=reduction,
        use_weight=use_weight, total_b=B, tile_b=tile_b)

    cost = pl.CostEstimate(
        flops=8 * B * C + 16 * B,
        transcendentals=B * C + 4 * B,          # exp over the class axis dominates
        bytes_accessed=b_pad * C * itemsize + b_pad * 4
                       + (b_pad * 4 if use_weight else 0) + out_bytes)

    vmem_limit = int(min(_vmem_capacity_bytes() * 3 // 4, 96 * 1024 * 1024))

    out = pl.pallas_call(
        kernel,
        out_shape=out_shape,
        grid=(num_tiles,),
        in_specs=in_specs,
        out_specs=out_spec,
        compiler_params=pltpu.CompilerParams(
            dimension_semantics=("parallel",),
            vmem_limit_bytes=vmem_limit),
        cost_estimate=cost,
    )(*args)

    if reduction == 'none':
        return out.reshape(b_pad)[:B]
    total = jnp.sum(out)
    if reduction == 'mean':
        return total / jnp.float32(B)
    return total


def _reference(logits, targets, gamma, weight, reduction):
    """Pure-JAX reference mirroring the PyTorch module."""
    log_probs = jax.nn.log_softmax(logits.astype(jnp.float32), axis=-1)
    probs = jnp.exp(log_probs)
    log_pt = jnp.take_along_axis(log_probs, targets[:, None], axis=1)[:, 0]
    pt = jnp.take_along_axis(probs, targets[:, None], axis=1)[:, 0]
    focal_term = (1.0 - pt) ** gamma
    if weight is not None:
        at = weight[targets]
        log_pt = log_pt * at
    loss = -focal_term * log_pt
    if reduction == 'mean':
        return loss.mean()
    elif reduction == 'sum':
        return loss.sum()
    return loss


if __name__ == "__main__":
    key = jax.random.PRNGKey(0)
    k_logits, k_targets = jax.random.split(key)

    B, C = 8, 16  # batch_size, num_classes
    logits = jax.random.normal(k_logits, (B, C), dtype=jnp.float32)
    targets = jax.random.randint(k_targets, (B,), 0, C, dtype=jnp.int32)
    class_weight = jnp.linspace(0.5, 1.5, C, dtype=jnp.float32)

    # 1) mean + class weights, gamma=2 (square fast-path)
    out = sparse_categorical_focal_loss(logits, targets, gamma=2.0,
                                        weight=class_weight, reduction='mean')
    out = jax.block_until_ready(out)
    ref = _reference(logits, targets, 2.0, class_weight, 'mean')
    assert jnp.allclose(out, ref, atol=1e-5, rtol=1e-5), (out, ref)

    # 2) sum, no weights, non-integer gamma (pow path), B not a multiple of 8
    B2 = 10
    logits2 = jax.random.normal(jax.random.PRNGKey(1), (B2, C), dtype=jnp.float32)
    targets2 = jax.random.randint(jax.random.PRNGKey(2), (B2,), 0, C, dtype=jnp.int32)
    out2 = sparse_categorical_focal_loss(logits2, targets2, gamma=1.5,
                                         weight=None, reduction='sum')
    out2 = jax.block_until_ready(out2)
    ref2 = _reference(logits2, targets2, 1.5, None, 'sum')
    assert jnp.allclose(out2, ref2, atol=1e-5, rtol=1e-5), (out2, ref2)

    # 3) 'none' with a forced small tile -> multi-tile grid + batch padding,
    #    lane-dense output path
    B3 = 20
    logits3 = jax.random.normal(jax.random.PRNGKey(3), (B3, C), dtype=jnp.float32)
    targets3 = jax.random.randint(jax.random.PRNGKey(4), (B3,), 0, C, dtype=jnp.int32)
    out3 = sparse_categorical_focal_loss(logits3, targets3, gamma=2.0,
                                         weight=class_weight, reduction='none',
                                         tile_b=8)
    out3 = jax.block_until_ready(out3)
    ref3 = _reference(logits3, targets3, 2.0, class_weight, 'none')
    assert out3.shape == (B3,)
    assert jnp.allclose(out3, ref3, atol=1e-5, rtol=1e-5), (out3, ref3)

    # 4) multi-tile 'mean' with padded-row masking in the partial sums
    out4 = sparse_categorical_focal_loss(logits3, targets3, gamma=2.0,
                                         weight=None, reduction='mean', tile_b=8)
    out4 = jax.block_until_ready(out4)
    ref4 = _reference(logits3, targets3, 2.0, None, 'mean')
    assert jnp.allclose(out4, ref4, atol=1e-5, rtol=1e-5), (out4, ref4)

    # 5) bf16 logits (half the HBM traffic; f32 math inside the kernel)
    out5 = sparse_categorical_focal_loss(logits.astype(jnp.bfloat16), targets,
                                         gamma=2.0, weight=class_weight,
                                         reduction='mean')
    out5 = jax.block_until_ready(out5)
    ref5 = _reference(logits.astype(jnp.bfloat16).astype(jnp.float32), targets,
                      2.0, class_weight, 'mean')
    assert jnp.allclose(out5, ref5, atol=1e-4, rtol=1e-4), (out5, ref5)

    # 6) larger batch, default tile picker (128-multiple tiles, >=2 tiles for
    #    v7x megacore, padded last tile), both 'mean' and 'none'
    B6 = 300
    logits6 = jax.random.normal(jax.random.PRNGKey(5), (B6, C), dtype=jnp.float32)
    targets6 = jax.random.randint(jax.random.PRNGKey(6), (B6,), 0, C, dtype=jnp.int32)
    out6 = sparse_categorical_focal_loss(logits6, targets6, gamma=2.0,
                                         weight=class_weight, reduction='mean')
    out6 = jax.block_until_ready(out6)
    ref6 = _reference(logits6, targets6, 2.0, class_weight, 'mean')
    assert jnp.allclose(out6, ref6, atol=1e-5, rtol=1e-5), (out6, ref6)

    out7 = sparse_categorical_focal_loss(logits6, targets6, gamma=2.0,
                                         weight=None, reduction='none')
    out7 = jax.block_until_ready(out7)
    ref7 = _reference(logits6, targets6, 2.0, None, 'none')
    assert out7.shape == (B6,)
    assert jnp.allclose(out7, ref7, atol=1e-5, rtol=1e-5), (out7, ref7)

    print("KERNEL_OK")
</pallas_src>

<mosaic_0001>
module attributes {stable_mosaic.version = 11 : i64} {
  func.func @_focal_loss_kernel(%arg0: i32, %arg1: memref<8x16xf32, #tpu.memory_space<vmem>>, %arg2: memref<1x1x8xi32, #tpu.memory_space<vmem>>, %arg3: memref<1x1x8xf32, #tpu.memory_space<vmem>>, %arg4: memref<1x1x1xf32, #tpu.memory_space<vmem>>) attributes {dimension_semantics = [#tpu.dimension_semantics<parallel>], iteration_bounds = array<i64: 1>, scalar_prefetch = 0 : i64, scratch_operands = 0 : i64, tpu.core_type = #tpu.core_type<tc>, window_params = [{transform_indices = @transform_0, window_bounds = array<i64: 8, 16>}, {transform_indices = @transform_1, window_bounds = array<i64: 1, 1, 8>}, {transform_indices = @transform_2, window_bounds = array<i64: 1, 1, 8>}, {transform_indices = @transform_3, window_bounds = array<i64: 1, 1, 1>}]} {
    %c0 = arith.constant 0 : index
    %c0_0 = arith.constant 0 : index
    %0 = vector.load %arg1[%c0, %c0_0] : memref<8x16xf32, #tpu.memory_space<vmem>>, vector<8x16xf32>
    %c0_1 = arith.constant 0 : index
    %c0_2 = arith.constant 0 : index
    %c0_3 = arith.constant 0 : index
    %1 = vector.load %arg2[%c0_1, %c0_2, %c0_3] : memref<1x1x8xi32, #tpu.memory_space<vmem>>, vector<1x1x8xi32>
    %2 = vector.shape_cast %1 : vector<1x1x8xi32> to vector<1x8xi32>
    %3 = tpu.transpose %2, [1, 0] : vector<1x8xi32> -> vector<8x1xi32>
    %cst = arith.constant dense<0xFF800000> : vector<8xf32>
    %4 = vector.multi_reduction <maximumf>, %0, %cst [1] : vector<8x16xf32> to vector<8xf32>
    %5 = vector.shape_cast %4 : vector<8xf32> to vector<8x1xf32>
    %6 = vector.broadcast %5 : vector<8x1xf32> to vector<8x16xf32>
    %7 = arith.subf %0, %6 : vector<8x16xf32>
    %8 = math.exp %7 : vector<8x16xf32>
    %cst_4 = arith.constant dense<0.000000e+00> : vector<8xf32>
    %9 = vector.multi_reduction <add>, %8, %cst_4 [1] : vector<8x16xf32> to vector<8xf32>
    %10 = vector.shape_cast %9 : vector<8xf32> to vector<8x1xf32>
    %11 = math.log %10 : vector<8x1xf32>
    %12 = tpu.iota {dimensions = array<i32: 1>} : vector<1x16xi32>
    %13 = vector.broadcast %12 : vector<1x16xi32> to vector<8x16xi32>
    %14 = vector.broadcast %3 : vector<8x1xi32> to vector<8x16xi32>
    %15 = arith.cmpi eq, %13, %14 : vector<8x16xi32>
    %cst_5 = arith.constant 0.000000e+00 : f32
    %16 = vector.broadcast %cst_5 : f32 to vector<8x16xf32>
    %17 = arith.select %15, %7, %16 : vector<8x16xi1>, vector<8x16xf32>
    %cst_6 = arith.constant dense<0.000000e+00> : vector<8xf32>
    %18 = vector.multi_reduction <add>, %17, %cst_6 [1] : vector<8x16xf32> to vector<8xf32>
    %19 = vector.shape_cast %18 : vector<8xf32> to vector<8x1xf32>
    %20 = arith.subf %19, %11 : vector<8x1xf32>
    %21 = math.exp %20 : vector<8x1xf32>
    %cst_7 = arith.constant 1.000000e+00 : f32
    %22 = vector.broadcast %cst_7 : f32 to vector<8x1xf32>
    %23 = arith.subf %22, %21 : vector<8x1xf32>
    %cst_8 = arith.constant 0.000000e+00 : f32
    %24 = vector.broadcast %cst_8 : f32 to vector<8x1xf32>
    %25 = arith.maximumf %23, %24 : vector<8x1xf32>
    %26 = arith.mulf %25, %25 : vector<8x1xf32>
    %27 = arith.mulf %26, %20 : vector<8x1xf32>
    %cst_9 = arith.constant 0.000000e+00 : f32
    %28 = vector.broadcast %cst_9 : f32 to vector<8x1xf32>
    %29 = arith.subf %28, %27 : vector<8x1xf32>
    %30 = tpu.transpose %29, [1, 0] : vector<8x1xf32> -> vector<1x8xf32>
    %c0_10 = arith.constant 0 : index
    %c0_11 = arith.constant 0 : index
    %c0_12 = arith.constant 0 : index
    %31 = vector.load %arg3[%c0_10, %c0_11, %c0_12] : memref<1x1x8xf32, #tpu.memory_space<vmem>>, vector<1x1x8xf32>
    %32 = vector.shape_cast %31 : vector<1x1x8xf32> to vector<1x8xf32>
    %33 = arith.mulf %30, %32 : vector<1x8xf32>
    %34 = tpu.iota {dimensions = array<i32: 1>} : vector<1x8xi32>
    %c8_i32 = arith.constant 8 : i32
    %35 = arith.muli %arg0, %c8_i32 : i32
    %36 = vector.broadcast %35 : i32 to vector<1x8xi32>
    %37 = arith.addi %34, %36 : vector<1x8xi32>
    %c8_i32_13 = arith.constant 8 : i32
    %38 = vector.broadcast %c8_i32_13 : i32 to vector<1x8xi32>
    %39 = arith.cmpi slt, %37, %38 : vector<1x8xi32>
    %cst_14 = arith.constant 0.000000e+00 : f32
    %40 = vector.broadcast %cst_14 : f32 to vector<1x8xf32>
    %41 = arith.select %39, %33, %40 : vector<1x8xi1>, vector<1x8xf32>
    %42 = vector.shape_cast %41 : vector<1x8xf32> to vector<1x1x8xf32>
    %cst_15 = arith.constant dense<0.000000e+00> : vector<1xf32>
    %43 = vector.multi_reduction <add>, %42, %cst_15 [1, 2] : vector<1x1x8xf32> to vector<1xf32>
    %44 = vector.shape_cast %43 : vector<1xf32> to vector<1x1x1xf32>
    %45 = vector.extract %44[0, 0, 0] : f32 from vector<1x1x1xf32>
    %46 = vector.broadcast %45 : f32 to vector<1x1x1xf32>
    %c0_16 = arith.constant 0 : index
    %c0_17 = arith.constant 0 : index
    %c0_18 = arith.constant 0 : index
    %47 = vector.load %arg4[%c0_16, %c0_17, %c0_18] : memref<1x1x1xf32, #tpu.memory_space<vmem>>, vector<1x1x1xf32>
    tpu.vector_store %arg4[%c0_16, %c0_17, %c0_18], %46 {strides = array<i32>} : memref<1x1x1xf32, #tpu.memory_space<vmem>>, vector<1x1x1xf32>,
    return
  }
  func.func @transform_0(%arg0: i32) -> (i32, i32) {
    %c0_i32 = arith.constant 0 : i32
    %c0_i32_0 = arith.constant 0 : i32
    return %arg0, %c0_i32 : i32, i32
  }
  func.func @transform_1(%arg0: i32) -> (i32, i32, i32) {
    %c0_i32 = arith.constant 0 : i32
    %c0_i32_0 = arith.constant 0 : i32
    %c0_i32_1 = arith.constant 0 : i32
    return %arg0, %c0_i32, %c0_i32_0 : i32, i32, i32
  }
  func.func @transform_2(%arg0: i32) -> (i32, i32, i32) {
    %c0_i32 = arith.constant 0 : i32
    %c0_i32_0 = arith.constant 0 : i32
    %c0_i32_1 = arith.constant 0 : i32
    return %arg0, %c0_i32, %c0_i32_0 : i32, i32, i32
  }
  func.func @transform_3(%arg0: i32) -> (i32, i32, i32) {
    %c0_i32 = arith.constant 0 : i32
    %c0_i32_0 = arith.constant 0 : i32
    %c0_i32_1 = arith.constant 0 : i32
    return %arg0, %c0_i32, %c0_i32_0 : i32, i32, i32
  }
}

</mosaic_0001>

<llo_original>
// kernel: tpu_custom_call.1
$region0: #{tpu_custom_call.1}
  #allocation0 [shape = 'u32[]', space=smem, size = 0x4, offset = 0x4, fixed_abs, tag = 'smem constant byte address 0x4 - core index']
  #allocation1 [shape = 'u32[144,128]{1,0:T(1,128)}', space=vmem, size = 0x12000, scoped, tag = 'internal scratch']
  %s0 = inlined_call_operand.hbm [shape: f32[8,16], index: 0, kind: input, shape index: {}]
  %s1 = inlined_call_operand.vmem [shape: s32[1,1,8], index: 1, kind: input, shape index: {}]
  %s2 = inlined_call_operand.vmem [shape: f32[1,1,8], index: 2, kind: input, shape index: {}]
  %s3 = inlined_call_operand.hbm [shape: f32[1,1,1], index: 3, kind: output, shape index: {}]
  %s4 = sld [smem:[#allocation0]]
  $region26: #{tpu_custom_call.1} parent=0
    _
  %s6 = ssub.s32 1, %s4
  %s7 = scalar_select 0, %s6, %s4
  $region1: #{tpu_custom_call.1} parent=0
    #allocation2 [shape = 'u8[4096]{0}', space=vmem, size = 0x1000, scoped, tag = 'input window, operand 0, single buffered']
    #allocation3 [shape = 's32[1]{0}', space=sflag, size = 0x4, scoped, tag = 'scoped memory for tpu_custom_call.1']
    #allocation4 [shape = 's32[1]{0}', space=sflag, size = 0x4, scoped, tag = 'scoped memory for tpu_custom_call.1']
    #allocation5 [shape = 'u8[512]{0}', space=vmem, size = 0x400, scoped, tag = 'output window, operand 0, single buffered']
    %8 = vsyncpa [#allocation3], 0
    %9 = vsyncpa [#allocation4], 0
    // Predicated region
    $region2: #{tpu_custom_call.1} parent=1 // pred_check
      _
    $region3: #{tpu_custom_call.1} parent=1 // pred_check_branch
      %11 = sbr.rel (0) target = $region5
    $region4: #{tpu_custom_call.1} parent=1 // pred_region
      %s13 = ssub.s32 128, 128
      %14 = vsyncadd [#allocation3], %s13
      %s16 = sshll.u32 [#allocation2], 4
      %s17 = int_to_ptr.vmem [resolvable:$true] %s16
      %19 = dma.hbm_to_vmem [thread:$0]  %s0, 128, %s17, [#allocation3]
    $region5: #{tpu_custom_call.1} parent=1 // pred_fallthru
      _
    // Predicated region
    $region6: #{tpu_custom_call.1} parent=1 // pred_check
      _
    $region7: #{tpu_custom_call.1} parent=1 // pred_check_branch
      %21 = sbr.rel (0) target = $region9
    $region8: #{tpu_custom_call.1} parent=1 // pred_region
      _
    $region9: #{tpu_custom_call.1} parent=1 // pred_fallthru
      _
    // Predicated region
    $region10: #{tpu_custom_call.1} parent=1 // pred_check
      _
    $region11: #{tpu_custom_call.1} parent=1 // pred_check_branch
      %23 = sbr.rel (0) target = $region13
    $region12: #{tpu_custom_call.1} parent=1 // pred_region
      _
    $region13: #{tpu_custom_call.1} parent=1 // pred_fallthru
      _
    // Predicated region
    $region14: #{tpu_custom_call.1} parent=1 // pred_check
      _
    $region15: #{tpu_custom_call.1} parent=1 // pred_check_branch
      %25 = sbr.rel (0) target = $region17
    $region16: #{tpu_custom_call.1} parent=1 // pred_region
      %26 = dma.done [#allocation3], 128
    $region17: #{tpu_custom_call.1} parent=1 // pred_fallthru
      _
    %v27 = vld [vmem:[#allocation2] sm:$0xff]
    %v28 = vld [vmem:[%s1] sm:$0x1]
    %29 = vxpose.xlu0.b32.start [1/16] %v28, 128
    %30 = vxpose.xlu0.b32.cont [2/16] 0, 128
    %31 = vxpose.xlu0.b32.cont [3/16] 0, 128
    %32 = vxpose.xlu0.b32.cont [4/16] 0, 128
    %33 = vxpose.xlu0.b32.cont [5/16] 0, 128
    %34 = vxpose.xlu0.b32.cont [6/16] 0, 128
    %35 = vxpose.xlu0.b32.cont [7/16] 0, 128
    %36 = vxpose.xlu0.b32.cont [8/16] 0, 128
    %37 = vxpose.xlu0.b32.cont [9/16] 0, 128
    %38 = vxpose.xlu0.b32.cont [10/16] 0, 128
    %39 = vxpose.xlu0.b32.cont [11/16] 0, 128
    %40 = vxpose.xlu0.b32.cont [12/16] 0, 128
    %41 = vxpose.xlu0.b32.cont [13/16] 0, 128
    %42 = vxpose.xlu0.b32.cont [14/16] 0, 128
    %43 = vxpose.xlu0.b32.cont [15/16] 0, 128
    %44 = vxpose.xlu0.b32.end [16/16] 0, 128
    %v45 = vpop.trf.xlu0
    %v46 = vpop.trf.xlu0
    %v47 = vpop.trf.xlu0
    %v48 = vpop.trf.xlu0
    %v49 = vpop.trf.xlu0
    %v50 = vpop.trf.xlu0
    %v51 = vpop.trf.xlu0
    %v52 = vpop.trf.xlu0
    %v53 = vpop.trf.xlu0
    %v54 = vpop.trf.xlu0
    %v55 = vpop.trf.xlu0
    %v56 = vpop.trf.xlu0
    %v57 = vpop.trf.xlu0
    %v58 = vpop.trf.xlu0
    %v59 = vpop.trf.xlu0
    %v60 = vpop.trf.xlu0
    %vm61 = vcmask 130048
    %v62 = vsel %vm61, %v27, -inf
    %63 = vmax.xlane.f32.xlu0 %v62
    %v64 = vpop.xlane.xlu0 %63
    %v65 = vsub.f32 %v27, %v64
    %v66 = vmul.f32 %v65, 1.442695
    %v67 = vpow.pop %v66
    %v68 = vsel %vm61, %v67, 0.0
    %69 = vadd.xlane.f32.xlu0 %v68
    %v70 = vpop.xlane.xlu0 %69
    %v71 = vlog2.pop %v70
    %v72 = vmul.f32 %v71, 0.6931472
    %v73 = vlaneseq
    %v74 = vand.u32 %v73, 127
    %75 = vset.pattern.permute.xlu0 0
    %76 = vperm.xlu0 %75, %v45
    %v77 = vpop.permute.xlu0 %76
    %vm78 = vcmp.eq.s32.totalorder %v74, %v77
    %v79 = vsel %vm78, %v65, 0.0
    %v80 = vsel %vm61, %v79, 0.0
    %81 = vadd.xlane.f32.xlu0 %v80
    %v82 = vpop.xlane.xlu0 %81
    %v83 = vsub.f32 %v82, %v72
    %v84 = vmul.f32 %v83, 1.442695
    %v85 = vpow.pop %v84
    %v86 = vsub.f32 1.0, %v85
    %v87 = vmax.f32 %v86, 0.0
    %v88 = vmul.f32 %v87, %v87
    %v89 = vmul.f32 %v88, %v83
    %v90 = vsub.f32 0.0, %v89
    %91 = vxpose.xlu0.b32.start [1/16] %v90, 128
    %92 = vxpose.xlu0.b32.cont [2/16] 0.0, 128
    %93 = vxpose.xlu0.b32.cont [3/16] 0.0, 128
    %94 = vxpose.xlu0.b32.cont [4/16] 0.0, 128
    %95 = vxpose.xlu0.b32.cont [5/16] 0.0, 128
    %96 = vxpose.xlu0.b32.cont [6/16] 0.0, 128
    %97 = vxpose.xlu0.b32.cont [7/16] 0.0, 128
    %98 = vxpose.xlu0.b32.cont [8/16] 0.0, 128
    %99 = vxpose.xlu0.b32.cont [9/16] 0.0, 128
    %100 = vxpose.xlu0.b32.cont [10/16] 0.0, 128
    %101 = vxpose.xlu0.b32.cont [11/16] 0.0, 128
    %102 = vxpose.xlu0.b32.cont [12/16] 0.0, 128
    %103 = vxpose.xlu0.b32.cont [13/16] 0.0, 128
    %104 = vxpose.xlu0.b32.cont [14/16] 0.0, 128
    %105 = vxpose.xlu0.b32.cont [15/16] 0.0, 128
    %106 = vxpose.xlu0.b32.end [16/16] 0.0, 128
    %v107 = vpop.trf.xlu0
    %v108 = vpop.trf.xlu0
    %v109 = vpop.trf.xlu0
    %v110 = vpop.trf.xlu0
    %v111 = vpop.trf.xlu0
    %v112 = vpop.trf.xlu0
    %v113 = vpop.trf.xlu0
    %v114 = vpop.trf.xlu0
    %v115 = vpop.trf.xlu0
    %v116 = vpop.trf.xlu0
    %v117 = vpop.trf.xlu0
    %v118 = vpop.trf.xlu0
    %v119 = vpop.trf.xlu0
    %v120 = vpop.trf.xlu0
    %v121 = vpop.trf.xlu0
    %v122 = vpop.trf.xlu0
    %v123 = vld [vmem:[%s2] sm:$0x1]
    %v124 = vmul.f32 %v107, %v123
    %s125 = smul.u32 0, 8
    %v126 = vstv %s125
    %v127 = vadd.s32 %v74, %v126
    %vm128 = vcmp.lt.s32.totalorder %v127, 8
    %v129 = vsel %vm128, %v124, 0.0
    %vm130 = vcmask 57344
    %v131 = vsel %vm130, %v129, 0.0
    %132 = vadd.xlane.f32.xlu0 %v131
    %v133 = vpop.xlane.xlu0 %132
    %v134 = vrot.slane %v133, 4
    %v135 = vadd.f32 %v133, %v134
    %v136 = vrot.slane %v135, 2
    %v137 = vadd.f32 %v135, %v136
    %v138 = vrot.slane %v137, 1
    %v139 = vadd.f32 %v137, %v138
    %s140 = vtos %v139
    %v141 = vstv %s140
    %vm142 = vcmask 0
    %143 = vst.msk [vmem:[#allocation5] sm:$0x1] %vm142, %v141
    // Predicated region
    $region18: #{tpu_custom_call.1} parent=1 // pred_check
      _
    $region19: #{tpu_custom_call.1} parent=1 // pred_check_branch
      %145 = sbr.rel (0) target = $region21
    $region20: #{tpu_custom_call.1} parent=1 // pred_region
      %s147 = ssub.s32 16, 16
      %148 = vsyncadd [#allocation4], %s147
      %s150 = sshll.u32 [#allocation5], 4
      %s151 = int_to_ptr.vmem [resolvable:$true] %s150
      %153 = dma.vmem_to_hbm [thread:$0]  %s151, 16, %s3, [#allocation4]
    $region21: #{tpu_custom_call.1} parent=1 // pred_fallthru
      _
    // Predicated region
    $region22: #{tpu_custom_call.1} parent=1 // pred_check
      _
    $region23: #{tpu_custom_call.1} parent=1 // pred_check_branch
      %155 = sbr.rel (0) target = $region25
    $region24: #{tpu_custom_call.1} parent=1 // pred_region
      %156 = dma.done [#allocation4], 16
    $region25: #{tpu_custom_call.1} parent=1 // pred_fallthru
      _
    %157 = vsyncpa [#allocation3], 1
    %158 = vsyncpa [#allocation4], 1

</llo_original>
